<compile_context>
chip_gen: v7x
topology: tpu7x:2x2x1
jax: 0.10.0
libtpu: 0.0.40
codegen_flags: <defaults>
</compile_context>

<pallas_src>
import jax
import jax.numpy as jnp
import numpy as np
from jax.experimental import pallas as pl
from jax.experimental.pallas import tpu as pltpu

_F = 20          # feature width fixed by the module
_AUG = 24        # augmented contraction width (8-sublane aligned)
_LANES = 128     # lane-dense last dim -> contiguous DMAs
_SLAB_ROWS = 48  # two 24-row (8-aligned) weight blocks


def fancy_mlp_kernel(x_ref, p_ref, out_ref):
    # x_ref: (rows, 128). cols 0:20 = features, col 20 = 1.0 for valid rows
    # (0 for padded rows), everything else 0.  Padded rows are all-zero, so they
    # stay exactly zero through both augmented matmuls -> no masking needed.
    x = x_ref[:, 0:_AUG]                          # (rows, 24)
    w1 = p_ref[0:_AUG, :]                         # (24, 128): [W^T @ R | b@R+1 | ones-passthrough]
    w2 = p_ref[_AUG:2 * _AUG, :]                  # (24, 128): [W^T | b]

    # h = relu(x @ (W^T @ R) + (b @ R + 1)); column 20 carries the valid-row
    # indicator (relu(1) = 1 for valid rows, 0 for padded rows).
    h = jnp.maximum(jnp.dot(x, w1, preferred_element_type=jnp.float32), 0.0)
    # y = h @ W^T + b ; padded rows and columns >= 20 are exactly zero.
    y = jnp.dot(h[:, 0:_AUG], w2, preferred_element_type=jnp.float32)

    # Frobenius norm (lane reduce then sublane reduce -> (1,1) kept in a vreg).
    nsq = jnp.sum(jnp.sum(y * y, axis=1, keepdims=True), axis=0, keepdims=True)
    norm = jnp.sqrt(nsq)                          # (1, 1) f32

    # while x.norm() > 1: x /= 2
    # Halving is an exact power-of-two scale, so the loop == multiply by 2**-k
    # with k = #halvings, derived bit-exactly from the f32 exponent/mantissa:
    # norm == 2^m -> k = m; otherwise k = e + 1.
    bits = pltpu.bitcast(norm, jnp.int32)         # (1, 1) i32
    e = ((bits >> 23) & 0xFF) - 127               # unbiased exponent
    mant = bits & 0x7FFFFF
    k = jnp.where(norm > 1.0, e + jnp.where(mant != 0, 1, 0), 0)
    k = jnp.clip(k, 0, 126)                       # keep 2**-k a normal f32
    scale = pltpu.bitcast((127 - k) << 23, jnp.float32)   # exactly 2**-k

    # if x.norm() < 0.8: x *= 10   (post-halving norm; power-of-two rescaling of
    # the norm is bit-exact, so norm*scale == ||x * scale||).
    scale = jnp.where(norm * scale < 0.8, scale * 10.0, scale)

    # return x.sum() -- scale applied to the already-reduced (1,1) sum, not to
    # the full tile (drops a full-tile VPU multiply + broadcast).
    total = jnp.sum(jnp.sum(y, axis=1, keepdims=True), axis=0, keepdims=True)
    out_ref[0, 0] = jnp.sum(scale * total)


def prepare_fancy_mlp_params(linear_w, linear_b, rand_weight):
    """Build the static (48, 128) parameter slab ONCE (hoisted out of the call path).

    linear_w: (20, 20) PyTorch (out, in) convention; linear_b: (20,); rand_weight: (20, 20).
    """
    wt = jnp.transpose(linear_w).astype(jnp.float32)      # (in, out)
    r = rand_weight.astype(jnp.float32)
    b = linear_b.astype(jnp.float32)
    w1 = wt @ r                                           # fuse first two matmuls
    b1 = b @ r + 1.0                                      # fused bias (+1 from relu arg)

    slab = jnp.zeros((_SLAB_ROWS, _LANES), jnp.float32)
    slab = slab.at[0:_F, 0:_F].set(w1)
    slab = slab.at[_F, 0:_F].set(b1)       # augmented bias row of matmul 1
    slab = slab.at[_F, _F].set(1.0)        # pass the ones-column through to h
    slab = slab.at[_AUG:_AUG + _F, 0:_F].set(wt)
    slab = slab.at[_AUG + _F, 0:_F].set(b)  # augmented bias row of matmul 2
    return slab


@jax.jit
def fancy_mlp(x, slab):
    """x: (B, 20) f32, slab: prebuilt (48, 128) param slab. Returns scalar f32."""
    B, F = x.shape
    assert F == _F, "FancyMLP is fixed to 20 features"
    rows = max(8, ((B + 7) // 8) * 8)      # pad batch to the f32 sublane multiple

    # Augmented, lane-dense input: one contiguous (rows, 128) f32 DMA.  The ones
    # column (col 20) is set only for valid rows, so padded rows remain all-zero.
    x_aug = jnp.zeros((rows, _LANES), jnp.float32)
    x_aug = x_aug.at[:B, 0:_F].set(x.astype(jnp.float32))
    x_aug = x_aug.at[:B, _F].set(1.0)

    out = pl.pallas_call(
        fancy_mlp_kernel,
        out_shape=jax.ShapeDtypeStruct((1, 1), jnp.float32),
        in_specs=[
            pl.BlockSpec(memory_space=pltpu.MemorySpace.VMEM),   # x_aug (contiguous)
            pl.BlockSpec(memory_space=pltpu.MemorySpace.VMEM),   # packed params
        ],
        out_specs=pl.BlockSpec(memory_space=pltpu.MemorySpace.SMEM),
        cost_estimate=pl.CostEstimate(
            flops=2 * 2 * rows * _AUG * _LANES,          # two (rows,24)x(24,128) dots
            transcendentals=1,                           # sqrt
            bytes_accessed=(rows * _LANES + _SLAB_ROWS * _LANES + 1) * 4,
        ),
    )(x_aug, slab)
    # NOTE: gridless single-block, single-core call on purpose -- splitting two
    # tiny dependent matmuls across v7x's 2 TCs is pure overhead.  To scale B up,
    # add a leading "parallel" grid axis over row tiles accumulating UNSCALED
    # sum(y) and sum(y*y) per block with a finalize at the last grid index (the
    # norm is global), rather than many gridless calls.
    return out[0, 0]


def fancy_mlp_reference(x, linear_w, linear_b, rand_weight):
    """Pure numpy replica of the PyTorch forward (unfused, faithful to the spec)."""
    x = np.asarray(x, np.float32)
    w = np.asarray(linear_w, np.float32)
    b = np.asarray(linear_b, np.float32)
    rw = np.asarray(rand_weight, np.float32)
    h = x @ w.T + b
    h = np.maximum(h @ rw + 1.0, 0.0)
    h = h @ w.T + b
    while np.linalg.norm(h) > 1.0:
        h = h / 2.0
    if np.linalg.norm(h) < 0.8:
        h = h * 10.0
    return np.float32(h.sum())


if __name__ == "__main__":
    key = jax.random.PRNGKey(0)
    k_x, k_w, k_b, k_r = jax.random.split(key, 4)

    B, F = 2, 20
    bound = 1.0 / np.sqrt(F)  # PyTorch nn.Linear default init range

    x = jax.random.uniform(k_x, (B, F), dtype=jnp.float32)                  # torch.rand(2, 20)
    linear_w = jax.random.uniform(k_w, (F, F), jnp.float32, -bound, bound)  # Linear.weight (out, in)
    linear_b = jax.random.uniform(k_b, (F,), jnp.float32, -bound, bound)    # Linear.bias
    rand_weight = jax.random.uniform(k_r, (F, F), dtype=jnp.float32)        # torch.rand(20, 20)

    # Static parameter packing done once, outside the per-call path.
    slab = prepare_fancy_mlp_params(linear_w, linear_b, rand_weight)

    out = fancy_mlp(x, slab)
    out = jax.block_until_ready(out)

    ref = fancy_mlp_reference(x, linear_w, linear_b, rand_weight)
    np.testing.assert_allclose(np.asarray(out), ref, rtol=1e-4, atol=1e-4)

    print("KERNEL_OK")
</pallas_src>

<mosaic_0001>
module attributes {stable_mosaic.version = 11 : i64} {
  func.func @fancy_mlp_kernel(%arg0: memref<8x128xf32, #tpu.memory_space<vmem>>, %arg1: memref<48x128xf32, #tpu.memory_space<vmem>>, %arg2: memref<1x1xf32, #tpu.memory_space<smem>>) attributes {dimension_semantics = [], scalar_prefetch = 0 : i64, scratch_operands = 0 : i64, tpu.core_type = #tpu.core_type<tc>} {
    %c0 = arith.constant 0 : index
    %c0_0 = arith.constant 0 : index
    %0 = vector.load %arg0[%c0, %c0_0] : memref<8x128xf32, #tpu.memory_space<vmem>>, vector<8x24xf32>
    %c0_1 = arith.constant 0 : index
    %c0_2 = arith.constant 0 : index
    %1 = vector.load %arg1[%c0_1, %c0_2] : memref<48x128xf32, #tpu.memory_space<vmem>>, vector<24x128xf32>
    %c24 = arith.constant 24 : index
    %c0_3 = arith.constant 0 : index
    %2 = vector.load %arg1[%c24, %c0_3] : memref<48x128xf32, #tpu.memory_space<vmem>>, vector<24x128xf32>
    %cst = arith.constant dense<0.000000e+00> : vector<8x128xf32>
    %3 = tpu.matmul %0, %1, %cst {dimension_numbers = #tpu.dot_dimension_numbers<[1], [0], [0], [1], [0, 0, 1, 1], [], []>} : vector<8x24xf32>, vector<24x128xf32>, vector<8x128xf32> -> vector<8x128xf32>
    %cst_4 = arith.constant 0.000000e+00 : f32
    %4 = vector.broadcast %cst_4 : f32 to vector<8x128xf32>
    %5 = arith.maximumf %3, %4 : vector<8x128xf32>
    %6 = vector.extract_strided_slice %5 {offsets = [0, 0], sizes = [8, 24], strides = [1, 1]} : vector<8x128xf32> to vector<8x24xf32>
    %cst_5 = arith.constant dense<0.000000e+00> : vector<8x128xf32>
    %7 = tpu.matmul %6, %2, %cst_5 {dimension_numbers = #tpu.dot_dimension_numbers<[1], [0], [0], [1], [0, 0, 1, 1], [], []>} : vector<8x24xf32>, vector<24x128xf32>, vector<8x128xf32> -> vector<8x128xf32>
    %8 = arith.mulf %7, %7 : vector<8x128xf32>
    %cst_6 = arith.constant dense<0.000000e+00> : vector<8xf32>
    %9 = vector.multi_reduction <add>, %8, %cst_6 [1] : vector<8x128xf32> to vector<8xf32>
    %10 = vector.shape_cast %9 : vector<8xf32> to vector<8x1xf32>
    %cst_7 = arith.constant dense<0.000000e+00> : vector<1xf32>
    %11 = vector.multi_reduction <add>, %10, %cst_7 [0] : vector<8x1xf32> to vector<1xf32>
    %12 = vector.shape_cast %11 : vector<1xf32> to vector<1x1xf32>
    %13 = math.sqrt %12 : vector<1x1xf32>
    %14 = tpu.bitcast %13 : vector<1x1xf32> -> vector<1x1xi32>
    %c23_i32 = arith.constant 23 : i32
    %15 = vector.broadcast %c23_i32 : i32 to vector<1x1xi32>
    %16 = arith.shrsi %14, %15 : vector<1x1xi32>
    %c255_i32 = arith.constant 255 : i32
    %17 = vector.broadcast %c255_i32 : i32 to vector<1x1xi32>
    %18 = arith.andi %16, %17 : vector<1x1xi32>
    %c127_i32 = arith.constant 127 : i32
    %19 = vector.broadcast %c127_i32 : i32 to vector<1x1xi32>
    %20 = arith.subi %18, %19 : vector<1x1xi32>
    %c8388607_i32 = arith.constant 8388607 : i32
    %21 = vector.broadcast %c8388607_i32 : i32 to vector<1x1xi32>
    %22 = arith.andi %14, %21 : vector<1x1xi32>
    %cst_8 = arith.constant 1.000000e+00 : f32
    %23 = vector.broadcast %cst_8 : f32 to vector<1x1xf32>
    %24 = arith.cmpf ogt, %13, %23 : vector<1x1xf32>
    %c0_i32 = arith.constant 0 : i32
    %25 = vector.broadcast %c0_i32 : i32 to vector<1x1xi32>
    %26 = arith.cmpi ne, %22, %25 : vector<1x1xi32>
    %c1_i32 = arith.constant 1 : i32
    %c0_i32_9 = arith.constant 0 : i32
    %27 = vector.broadcast %c1_i32 : i32 to vector<1x1xi32>
    %28 = vector.broadcast %c0_i32_9 : i32 to vector<1x1xi32>
    %29 = arith.select %26, %27, %28 : vector<1x1xi1>, vector<1x1xi32>
    %30 = arith.addi %20, %29 : vector<1x1xi32>
    %c0_i32_10 = arith.constant 0 : i32
    %31 = vector.broadcast %c0_i32_10 : i32 to vector<1x1xi32>
    %32 = arith.select %24, %30, %31 : vector<1x1xi1>, vector<1x1xi32>
    %c0_i32_11 = arith.constant 0 : i32
    %c126_i32 = arith.constant 126 : i32
    %33 = vector.broadcast %c0_i32_11 : i32 to vector<1x1xi32>
    %34 = arith.maxsi %33, %32 : vector<1x1xi32>
    %35 = vector.broadcast %c126_i32 : i32 to vector<1x1xi32>
    %36 = arith.minsi %35, %34 : vector<1x1xi32>
    %c127_i32_12 = arith.constant 127 : i32
    %37 = vector.broadcast %c127_i32_12 : i32 to vector<1x1xi32>
    %38 = arith.subi %37, %36 : vector<1x1xi32>
    %c23_i32_13 = arith.constant 23 : i32
    %39 = vector.broadcast %c23_i32_13 : i32 to vector<1x1xi32>
    %40 = arith.shli %38, %39 : vector<1x1xi32>
    %41 = tpu.bitcast %40 : vector<1x1xi32> -> vector<1x1xf32>
    %42 = arith.mulf %13, %41 : vector<1x1xf32>
    %cst_14 = arith.constant 8.000000e-01 : f32
    %43 = vector.broadcast %cst_14 : f32 to vector<1x1xf32>
    %44 = arith.cmpf olt, %42, %43 : vector<1x1xf32>
    %cst_15 = arith.constant 1.000000e+01 : f32
    %45 = vector.broadcast %cst_15 : f32 to vector<1x1xf32>
    %46 = arith.mulf %41, %45 : vector<1x1xf32>
    %47 = arith.select %44, %46, %41 : vector<1x1xi1>, vector<1x1xf32>
    %cst_16 = arith.constant dense<0.000000e+00> : vector<8xf32>
    %48 = vector.multi_reduction <add>, %7, %cst_16 [1] : vector<8x128xf32> to vector<8xf32>
    %49 = vector.shape_cast %48 : vector<8xf32> to vector<8x1xf32>
    %cst_17 = arith.constant dense<0.000000e+00> : vector<1xf32>
    %50 = vector.multi_reduction <add>, %49, %cst_17 [0] : vector<8x1xf32> to vector<1xf32>
    %51 = vector.shape_cast %50 : vector<1xf32> to vector<1x1xf32>
    %52 = arith.mulf %47, %51 : vector<1x1xf32>
    %53 = vector.shape_cast %52 : vector<1x1xf32> to vector<1x1x1xf32>
    %cst_18 = arith.constant dense<0.000000e+00> : vector<1xf32>
    %54 = vector.multi_reduction <add>, %53, %cst_18 [1, 2] : vector<1x1x1xf32> to vector<1xf32>
    %55 = vector.shape_cast %54 : vector<1xf32> to vector<1x1x1xf32>
    %56 = vector.extract %55[0, 0, 0] : f32 from vector<1x1x1xf32>
    %c0_19 = arith.constant 0 : index
    %c0_20 = arith.constant 0 : index
    %57 = memref.load %arg2[%c0_19, %c0_20] : memref<1x1xf32, #tpu.memory_space<smem>>
    memref.store %56, %arg2[%c0_19, %c0_20] : memref<1x1xf32, #tpu.memory_space<smem>>
    return
  }
}

</mosaic_0001>

<llo_original>
// kernel: fancy_mlp.1
$region0: #{fancy_mlp.1}
  #allocation0 [shape = 'u32[]', space=smem, size = 0x4, offset = 0x4, fixed_abs, tag = 'smem constant byte address 0x4 - core index']
  #allocation1 [shape = 'u32[144,128]{1,0:T(1,128)}', space=vmem, size = 0x12000, scoped, tag = 'internal scratch']
  %s0 = inlined_call_operand.vmem [shape: f32[8,128], index: 0, kind: input, shape index: {}]
  %s1 = inlined_call_operand.vmem [shape: f32[48,128], index: 1, kind: input, shape index: {}]
  %s2 = inlined_call_operand.hbm [shape: f32[1,1], index: 2, kind: output, shape index: {}]
  %s3 = sld [smem:[#allocation0]]
  $region18: #{fancy_mlp.1} parent=0
    _
  %s5 = ssub.s32 1, %s3
  %s6 = scalar_select 0, %s5, %s3
  $region1: #{fancy_mlp.1} parent=0
    #allocation2 [shape = 'u8[512]{0}', space=smem, size = 0x200, scoped, tag = 'output window, operand 0, single buffered']
    #allocation3 [shape = 's32[1]{0}', space=sflag, size = 0x4, scoped, tag = 'scoped memory for fancy_mlp.1']
    %7 = vsyncpa [#allocation3], 0
    // Predicated region
    $region2: #{fancy_mlp.1} parent=1 // pred_check
      _
    $region3: #{fancy_mlp.1} parent=1 // pred_check_branch
      %9 = sbr.rel (0) target = $region5
    $region4: #{fancy_mlp.1} parent=1 // pred_region
      _
    $region5: #{fancy_mlp.1} parent=1 // pred_fallthru
      _
    // Predicated region
    $region6: #{fancy_mlp.1} parent=1 // pred_check
      _
    $region7: #{fancy_mlp.1} parent=1 // pred_check_branch
      %11 = sbr.rel (0) target = $region9
    $region8: #{fancy_mlp.1} parent=1 // pred_region
      _
    $region9: #{fancy_mlp.1} parent=1 // pred_fallthru
      _
    %v12 = vld [vmem:[%s0] sm:$0xff]
    %v13 = vld [vmem:[%s1] sm:$0xff]
    %v14 = vld [vmem:[%s1 + $0x8] sm:$0xff]
    %v15 = vld [vmem:[%s1 + $0x10] sm:$0xff]
    %v16 = vld [vmem:[%s1 + $0x18] sm:$0xff]
    %v17 = vld [vmem:[%s1 + $0x20] sm:$0xff]
    %v18 = vld [vmem:[%s1 + $0x28] sm:$0xff]
    %vm19 = vcmask 195584
    %v21 = vsel %vm19, %v12, 0
    %23 = vmatprep.subr.mxu0 0.0
    %24 = vmatpush1.msra.mxu0 %v13
    %25 = vmatprep.subr.mxu0 0.0
    %26 = vmatpush1.msra.mxu0 %v14
    %27 = vmatprep.subr.mxu0 0.0
    %28 = vmatpush1.msra.mxu0 %v15
    %29 = vmatprep.subr.mxu0 0.0
    %30 = vmatpush1.msra.mxu0 0.0
    %31 = vmatprep.subr.mxu0 0.0
    %32 = vmatpush1.msra.mxu0 0.0
    %33 = vmatprep.subr.mxu0 0.0
    %34 = vmatpush1.msra.mxu0 0.0
    %35 = vmatprep.subr.mxu0 0.0
    %36 = vmatpush1.msra.mxu0 0.0
    %37 = vmatprep.subr.mxu0 0.0
    %38 = vmatpush1.msra.mxu0 0.0
    %39 = vmatprep.subr.mxu0 0.0
    %40 = vmatpush1.msra.mxu0 0.0
    %41 = vmatprep.subr.mxu0 0.0
    %42 = vmatpush1.msra.mxu0 0.0
    %43 = vmatprep.subr.mxu0 0.0
    %44 = vmatpush1.msra.mxu0 0.0
    %45 = vmatprep.subr.mxu0 0.0
    %46 = vmatpush1.msra.mxu0 0.0
    %47 = vmatprep.subr.mxu0 0.0
    %48 = vmatpush1.msra.mxu0 0.0
    %49 = vmatprep.subr.mxu0 0.0
    %50 = vmatpush1.msra.mxu0 0.0
    %51 = vmatprep.subr.mxu0 0.0
    %52 = vmatpush1.msra.mxu0 0.0
    %53 = vmatprep.subr.mxu0 0.0
    %54 = vmatpush1.msra.mxu0 0.0
    %55 = vmatprep.subr.mxu0 0.0
    %56 = vmatpush1.msra.mxu0 0.0
    %57 = vmatprep.subr.mxu0 0.0
    %58 = vmatpush1.msra.mxu0 0.0
    %59 = vmatprep.subr.mxu0 0.0
    %60 = vmatpush1.msra.mxu0 0.0
    %61 = vmatprep.subr.mxu0 0.0
    %62 = vmatpush1.msra.mxu0 0.0
    %63 = vmatprep.subr.mxu0 0.0
    %64 = vmatpush1.msra.mxu0 0.0
    %65 = vmatprep.subr.mxu0 0.0
    %66 = vmatpush1.msra.mxu0 0.0
    %67 = vmatprep.subr.mxu0 0.0
    %68 = vmatpush1.msra.mxu0 0.0
    %69 = vmatprep.subr.mxu0 0.0
    %70 = vmatpush1.msra.mxu0 0.0
    %71 = vmatprep.subr.mxu0 0.0
    %72 = vmatpush1.msra.mxu0 0.0
    %73 = vmatprep.subr.mxu0 0.0
    %74 = vmatpush1.msra.mxu0 0.0
    %75 = vmatprep.subr.mxu0 0.0
    %76 = vmatpush1.msra.mxu0 0.0
    %77 = vmatprep.subr.mxu0 0.0
    %78 = vmatpush1.msra.mxu0 0.0
    %79 = vmatprep.subr.mxu0 0.0
    %80 = vmatpush1.msra.mxu0 0.0
    %81 = vmatprep.subr.mxu0 0.0
    %82 = vmatpush1.msra.mxu0 0.0
    %83 = vmatprep.subr.mxu0 0.0
    %84 = vmatpush1.msra.mxu0 0.0
    %85 = vmatprep.subr.mxu0 0.0
    %86 = vmatpush1.msra.mxu0 0.0
    %87 = vmatprep.mubr.f32.mxu0 0.0
    %88 = vmatmul.mubr.f32.gmra.mrb[0].mxu0 %v21
    %v89 = vpop.f32.mrb[0].mxu0
    %v90 = vadd.f32 0.0, %v89
    %v91 = vpop.f32.mrb[0].mxu0
    %92 = vdwg.mxu0
    %v93 = vmax.f32 %v90, 0.0
    %v95 = vsel %vm19, %v93, 0
    %97 = vmatprep.subr.mxu0 0.0
    %98 = vmatpush1.msra.mxu0 %v16
    %99 = vmatprep.subr.mxu0 0.0
    %100 = vmatpush1.msra.mxu0 %v17
    %101 = vmatprep.subr.mxu0 0.0
    %102 = vmatpush1.msra.mxu0 %v18
    %103 = vmatprep.subr.mxu0 0.0
    %104 = vmatpush1.msra.mxu0 0.0
    %105 = vmatprep.subr.mxu0 0.0
    %106 = vmatpush1.msra.mxu0 0.0
    %107 = vmatprep.subr.mxu0 0.0
    %108 = vmatpush1.msra.mxu0 0.0
    %109 = vmatprep.subr.mxu0 0.0
    %110 = vmatpush1.msra.mxu0 0.0
    %111 = vmatprep.subr.mxu0 0.0
    %112 = vmatpush1.msra.mxu0 0.0
    %113 = vmatprep.subr.mxu0 0.0
    %114 = vmatpush1.msra.mxu0 0.0
    %115 = vmatprep.subr.mxu0 0.0
    %116 = vmatpush1.msra.mxu0 0.0
    %117 = vmatprep.subr.mxu0 0.0
    %118 = vmatpush1.msra.mxu0 0.0
    %119 = vmatprep.subr.mxu0 0.0
    %120 = vmatpush1.msra.mxu0 0.0
    %121 = vmatprep.subr.mxu0 0.0
    %122 = vmatpush1.msra.mxu0 0.0
    %123 = vmatprep.subr.mxu0 0.0
    %124 = vmatpush1.msra.mxu0 0.0
    %125 = vmatprep.subr.mxu0 0.0
    %126 = vmatpush1.msra.mxu0 0.0
    %127 = vmatprep.subr.mxu0 0.0
    %128 = vmatpush1.msra.mxu0 0.0
    %129 = vmatprep.subr.mxu0 0.0
    %130 = vmatpush1.msra.mxu0 0.0
    %131 = vmatprep.subr.mxu0 0.0
    %132 = vmatpush1.msra.mxu0 0.0
    %133 = vmatprep.subr.mxu0 0.0
    %134 = vmatpush1.msra.mxu0 0.0
    %135 = vmatprep.subr.mxu0 0.0
    %136 = vmatpush1.msra.mxu0 0.0
    %137 = vmatprep.subr.mxu0 0.0
    %138 = vmatpush1.msra.mxu0 0.0
    %139 = vmatprep.subr.mxu0 0.0
    %140 = vmatpush1.msra.mxu0 0.0
    %141 = vmatprep.subr.mxu0 0.0
    %142 = vmatpush1.msra.mxu0 0.0
    %143 = vmatprep.subr.mxu0 0.0
    %144 = vmatpush1.msra.mxu0 0.0
    %145 = vmatprep.subr.mxu0 0.0
    %146 = vmatpush1.msra.mxu0 0.0
    %147 = vmatprep.subr.mxu0 0.0
    %148 = vmatpush1.msra.mxu0 0.0
    %149 = vmatprep.subr.mxu0 0.0
    %150 = vmatpush1.msra.mxu0 0.0
    %151 = vmatprep.subr.mxu0 0.0
    %152 = vmatpush1.msra.mxu0 0.0
    %153 = vmatprep.subr.mxu0 0.0
    %154 = vmatpush1.msra.mxu0 0.0
    %155 = vmatprep.subr.mxu0 0.0
    %156 = vmatpush1.msra.mxu0 0.0
    %157 = vmatprep.subr.mxu0 0.0
    %158 = vmatpush1.msra.mxu0 0.0
    %159 = vmatprep.subr.mxu0 0.0
    %160 = vmatpush1.msra.mxu0 0.0
    %161 = vmatprep.mubr.f32.mxu0 0.0
    %162 = vmatmul.mubr.f32.gmra.mrb[0].mxu0 %v95
    %v163 = vpop.f32.mrb[0].mxu0
    %v164 = vadd.f32 0.0, %v163
    %v165 = vpop.f32.mrb[0].mxu0
    %166 = vdwg.mxu0
    %v167 = vmul.f32 %v164, %v164
    %168 = vadd.xlane.f32.xlu0 %v167
    %v169 = vpop.xlane.xlu0 %168
    %v170 = vrot.slane %v169, 4
    %v171 = vadd.f32 %v169, %v170
    %v172 = vrot.slane %v171, 2
    %v173 = vadd.f32 %v171, %v172
    %v174 = vrot.slane %v173, 1
    %v175 = vadd.f32 %v173, %v174
    %v176 = vrsqrt.pop %v175
    %v177 = vmul.f32 %v175, %v176
    %vm178 = vcmp.eq.f32.partialorder %v175, inf
    %v179 = vsel %vm178, %v175, %v177
    %vm180 = vcmp.eq.f32.partialorder %v175, 0.0
    %v181 = vand.u32 %v175, 2147483648
    %v182 = vsel %vm180, %v181, %v179
    %v184 = vshra.s32 %v182, 23
    %v185 = vand.u32 %v184, 255
    %v186 = vsub.s32 %v185, 127
    %v187 = vand.u32 %v182, 8388607
    %vm188 = vcmp.gt.f32.partialorder %v182, 1.0
    %vm189 = vcmp.ne.s32.totalorder %v187, 0
    %v190 = vsel %vm189, 1, 0
    %v191 = vadd.s32 %v186, %v190
    %v192 = vsel %vm188, %v191, 0
    %vm193 = vcmp.gt.s32.totalorder %v192, 0
    %v194 = vsel %vm193, %v192, 0
    %vm195 = vcmp.lt.s32.totalorder %v194, 126
    %v196 = vsel %vm195, %v194, 126
    %v197 = vsub.s32 127, %v196
    %v198 = vshll.u32 %v197, 23
    %v200 = vmul.f32 %v182, %v198
    %vm201 = vcmp.lt.f32.partialorder %v200, 0.8
    %v202 = vmul.f32 %v198, 10.0
    %v203 = vsel %vm201, %v202, %v198
    %204 = vadd.xlane.f32.xlu0 %v164
    %v205 = vpop.xlane.xlu0 %204
    %v206 = vrot.slane %v205, 4
    %v207 = vadd.f32 %v205, %v206
    %v208 = vrot.slane %v207, 2
    %v209 = vadd.f32 %v207, %v208
    %v210 = vrot.slane %v209, 1
    %v211 = vadd.f32 %v209, %v210
    %v212 = vmul.f32 %v203, %v211
    %v213 = vadd.f32 %v212, 0.0
    %s214 = vtos %v213
    %s215 = scalar_lea.smem [#allocation2], 0
    %216 = sst [smem:[%s215]] %s214
    // Predicated region
    $region10: #{fancy_mlp.1} parent=1 // pred_check
      _
    $region11: #{fancy_mlp.1} parent=1 // pred_check_branch
      %218 = sbr.rel (0) target = $region13
    $region12: #{fancy_mlp.1} parent=1 // pred_region
      %s220 = ssub.s32 16, 16
      %221 = vsyncadd [#allocation3], %s220
      %224 = dma.smem_to_hbm [#allocation2], 16, %s2, [#allocation3]
    $region13: #{fancy_mlp.1} parent=1 // pred_fallthru
      _
    // Predicated region
    $region14: #{fancy_mlp.1} parent=1 // pred_check
      _
    $region15: #{fancy_mlp.1} parent=1 // pred_check_branch
      %226 = sbr.rel (0) target = $region17
    $region16: #{fancy_mlp.1} parent=1 // pred_region
      %227 = dma.done [#allocation3], 16
    $region17: #{fancy_mlp.1} parent=1 // pred_fallthru
      _
    %228 = sfence
    %229 = vsyncpa [#allocation3], 1

</llo_original>
